<compile_context>
chip_gen: v7x
topology: tpu7x:2x2x1
jax: 0.10.0
libtpu: 0.0.40
codegen_flags: <defaults>
</compile_context>

<pallas_src>
import math

import jax
import jax.numpy as jnp
from jax import lax
from jax.experimental import pallas as pl
from jax.experimental.pallas import tpu as pltpu


def _choose_tile(s, cap):
    """Largest tile <= cap that divides s and is a multiple of 128, else full s."""
    if s <= cap:
        return s
    t = (cap // 128) * 128
    while t >= 128:
        if s % t == 0:
            return t
        t -= 128
    return s


# ---------------------------------------------------------------------------
# Kernel 1: fused QKV projection, native (N, C, S) input layout.
# ---------------------------------------------------------------------------
def _qkv_proj_kernel(x_ref, w_ref, b_ref, q_ref, k_ref, v_ref):
    """x_ref: (1, C, ts) f32 | w_ref: (C, 3C) bf16 (q-scale folded)
    b_ref: (1, 3C) f32 (q-scale folded) | q/k/v_ref: (1, ts, C) bf16."""
    c = x_ref.shape[1]
    # In-kernel layout flip (C, ts) -> (ts, C); XLU work hidden under MXU.
    xt = x_ref[0].T
    qkv = lax.dot_general(
        xt.astype(jnp.bfloat16), w_ref[...],
        dimension_numbers=(((1,), (0,)), ((), ())),
        preferred_element_type=jnp.float32)          # (ts, 3C) f32 accumulate
    qkv = qkv + b_ref[...]
    q_ref[0] = qkv[:, :c].astype(jnp.bfloat16)
    k_ref[0] = qkv[:, c:2 * c].astype(jnp.bfloat16)
    v_ref[0] = qkv[:, 2 * c:].astype(jnp.bfloat16)


# ---------------------------------------------------------------------------
# Kernel 2: flash attention (online softmax) + out-proj + bias + residual.
# ---------------------------------------------------------------------------
def _flash_attn_kernel(q_ref, k_ref, v_ref, xres_ref, wout_ref, bout_ref,
                       o_ref, m_scr, l_scr, acc_scr):
    """q_ref: (1, tq, C) bf16 (scale pre-folded)   k/v_ref: (1, tk, C) bf16
    xres_ref: (1, C, tq) f32 (native-layout residual)
    wout_ref: (C_out, C_in) bf16 (= W_out^T)   bout_ref: (C, 1) f32
    o_ref: (1, C, tq)   scratch: m/l (tq,1) f32, acc (tq,C) f32."""
    ki = pl.program_id(2)

    @pl.when(ki == 0)
    def _():
        m_scr[...] = jnp.full_like(m_scr, -jnp.inf)
        l_scr[...] = jnp.zeros_like(l_scr)
        acc_scr[...] = jnp.zeros_like(acc_scr)

    q = q_ref[0]                                   # (tq, C) bf16, scale folded in
    k = k_ref[0]                                   # (tk, C) bf16
    # scores = q @ k^T without materializing k.T (transposed-RHS contraction).
    s = lax.dot_general(q, k, dimension_numbers=(((1,), (1,)), ((), ())),
                        preferred_element_type=jnp.float32)      # (tq, tk) f32

    m_prev = m_scr[...]
    m_new = jnp.maximum(m_prev, jnp.max(s, axis=-1, keepdims=True))
    alpha = jnp.exp(m_prev - m_new)                # (tq, 1) EUP
    p = jnp.exp(s - m_new)                         # (tq, tk) f32 EUP
    l_scr[...] = alpha * l_scr[...] + jnp.sum(p, axis=-1, keepdims=True)
    acc_scr[...] = alpha * acc_scr[...] + jnp.dot(
        p.astype(jnp.bfloat16), v_ref[0], preferred_element_type=jnp.float32)
    m_scr[...] = m_new

    @pl.when(ki == pl.num_programs(2) - 1)
    def _():
        inv_l = pl.reciprocal(l_scr[...], approx=True)           # EUP, not a divide
        attn = (acc_scr[...] * inv_l).astype(jnp.bfloat16)       # (tq, C)
        # out^T (C_out, tq) = W_out^T contracted with attn over C_in
        # (transposed-RHS pattern) -> output produced in native (N, C, S) layout.
        out_t = lax.dot_general(wout_ref[...], attn,
                                dimension_numbers=(((1,), (1,)), ((), ())),
                                preferred_element_type=jnp.float32)
        out_t = out_t + bout_ref[...]                            # bias, once per q-tile
        o_ref[0] = (out_t + xres_ref[0].astype(jnp.float32)).astype(o_ref.dtype)


# ---------------------------------------------------------------------------
# Wrapper
# ---------------------------------------------------------------------------
def vae_attention_block(x, w_qkv, b_qkv, w_out, b_out):
    """x: (N, C, H, W) float32.  w_qkv: (C, 3C), b_qkv: (1, 3C),
    w_out: (C, C) (in,out), b_out: (1, C).  Returns (N, C, H, W)."""
    n, c, h, w = x.shape
    s = h * w
    x_ncs = x.reshape(n, c, s)                     # zero-copy, no HBM transpose

    # Fold the 1/sqrt(d_head) softmax scale (n_heads=1 -> d_head=C) into the
    # q columns of the fused projection; pre-cast weights to bf16 for the MXU.
    scale = 1.0 / math.sqrt(c)
    w_qkv_f = jnp.concatenate([w_qkv[:, :c] * scale, w_qkv[:, c:]],
                              axis=-1).astype(jnp.bfloat16)
    b_qkv_f = jnp.concatenate([b_qkv[:, :c] * scale, b_qkv[:, c:]],
                              axis=-1).astype(jnp.float32)
    w_out_t = jnp.transpose(w_out).astype(jnp.bfloat16)   # (C_out, C_in), trace-time
    b_out_c = jnp.reshape(b_out, (c, 1)).astype(jnp.float32)

    ts = _choose_tile(s, 512)      # projection seq tile
    tq = _choose_tile(s, 256)      # query tile   (fits v7x 64 MiB VMEM budget)
    tk = _choose_tile(s, 512)      # key/value tile

    q, k, v = pl.pallas_call(
        _qkv_proj_kernel,
        out_shape=(
            jax.ShapeDtypeStruct((n, s, c), jnp.bfloat16),
            jax.ShapeDtypeStruct((n, s, c), jnp.bfloat16),
            jax.ShapeDtypeStruct((n, s, c), jnp.bfloat16),
        ),
        grid_spec=pltpu.PrefetchScalarGridSpec(
            num_scalar_prefetch=0,
            grid=(n, s // ts),
            in_specs=[
                pl.BlockSpec((1, c, ts), lambda b, si: (b, 0, si)),   # x (N,C,S)
                pl.BlockSpec((c, 3 * c), lambda b, si: (0, 0)),       # W_qkv
                pl.BlockSpec((1, 3 * c), lambda b, si: (0, 0)),       # b_qkv
            ],
            out_specs=(
                pl.BlockSpec((1, ts, c), lambda b, si: (b, si, 0)),
                pl.BlockSpec((1, ts, c), lambda b, si: (b, si, 0)),
                pl.BlockSpec((1, ts, c), lambda b, si: (b, si, 0)),
            ),
        ),
        compiler_params=pltpu.CompilerParams(
            dimension_semantics=("parallel", "parallel"),
            vmem_limit_bytes=32 * 1024 * 1024),
    )(x_ncs, w_qkv_f, b_qkv_f)

    out_ncs = pl.pallas_call(
        _flash_attn_kernel,
        out_shape=jax.ShapeDtypeStruct((n, c, s), x.dtype),
        grid_spec=pltpu.PrefetchScalarGridSpec(
            num_scalar_prefetch=0,
            grid=(n, s // tq, s // tk),
            in_specs=[
                pl.BlockSpec((1, tq, c), lambda b, qi, ki: (b, qi, 0)),   # q
                pl.BlockSpec((1, tk, c), lambda b, qi, ki: (b, ki, 0)),   # k
                pl.BlockSpec((1, tk, c), lambda b, qi, ki: (b, ki, 0)),   # v
                pl.BlockSpec((1, c, tq), lambda b, qi, ki: (b, 0, qi)),   # residual
                pl.BlockSpec((c, c), lambda b, qi, ki: (0, 0)),           # W_out^T
                pl.BlockSpec((c, 1), lambda b, qi, ki: (0, 0)),           # b_out
            ],
            out_specs=pl.BlockSpec((1, c, tq), lambda b, qi, ki: (b, 0, qi)),
            scratch_shapes=[
                pltpu.VMEM((tq, 1), jnp.float32),    # running max m
                pltpu.VMEM((tq, 1), jnp.float32),    # running sum l
                pltpu.VMEM((tq, c), jnp.float32),    # output accumulator
            ],
        ),
        compiler_params=pltpu.CompilerParams(
            dimension_semantics=("parallel", "parallel", "arbitrary"),
            vmem_limit_bytes=32 * 1024 * 1024),
    )(q, k, v, x_ncs, w_out_t, b_out_c)

    # (N, C, S) -> (N, C, H, W): zero-copy reshape, no transpose needed.
    return out_ncs.reshape(n, c, h, w)


# ---------------------------------------------------------------------------
# Pure-JAX f32 reference for validation.
# ---------------------------------------------------------------------------
def _reference(x, w_qkv, b_qkv, w_out, b_out):
    n, c, h, w = x.shape
    s = h * w
    xs = jnp.transpose(x.reshape(n, c, s), (0, 2, 1)).astype(jnp.float32)
    qkv = jnp.einsum("nsc,cd->nsd", xs, w_qkv) + b_qkv
    q, k, v = qkv[..., :c], qkv[..., c:2 * c], qkv[..., 2 * c:]
    scores = jnp.einsum("nqc,nkc->nqk", q, k) / math.sqrt(c)
    p = jax.nn.softmax(scores, axis=-1)
    attn = jnp.einsum("nqk,nkc->nqc", p, v)
    out = jnp.einsum("nsc,cd->nsd", attn, w_out) + b_out
    out = out + xs
    return jnp.transpose(out, (0, 2, 1)).reshape(n, c, h, w).astype(x.dtype)


if __name__ == "__main__":
    # Small shapes consistent with the module (channels divisible by 32 so the
    # unused GroupNorm(32, C) would be constructible; C=128 keeps lanes dense).
    N, C, H, W = 2, 128, 8, 8

    key = jax.random.PRNGKey(0)
    kx, k1, k2, k3, k4 = jax.random.split(key, 5)

    x = jax.random.normal(kx, (N, C, H, W), dtype=jnp.float32)

    # SelfAttention(1, C) params in kernel-friendly (in, out) layout.
    scale_in = 1.0 / math.sqrt(C)
    w_qkv = jax.random.normal(k1, (C, 3 * C), dtype=jnp.float32) * scale_in
    b_qkv = jax.random.normal(k2, (1, 3 * C), dtype=jnp.float32) * scale_in
    w_out = jax.random.normal(k3, (C, C), dtype=jnp.float32) * scale_in
    b_out = jax.random.normal(k4, (1, C), dtype=jnp.float32) * scale_in

    y = jax.block_until_ready(vae_attention_block(x, w_qkv, b_qkv, w_out, b_out))
    y_ref = _reference(x, w_qkv, b_qkv, w_out, b_out)

    assert y.shape == x.shape and y.dtype == x.dtype
    max_err = float(jnp.max(jnp.abs(y - y_ref)))
    # bf16 MXU inputs + approx reciprocal -> slightly looser than f32 tolerance.
    assert jnp.allclose(y, y_ref, rtol=5e-2, atol=5e-2), f"mismatch, max_err={max_err}"

    print("KERNEL_OK")
</pallas_src>

<mosaic_0001>
module attributes {stable_mosaic.version = 11 : i64} {
  func.func @_qkv_proj_kernel(%arg0: i32, %arg1: i32, %arg2: memref<1x128x64xf32, #tpu.memory_space<vmem>>, %arg3: memref<128x384xbf16, #tpu.memory_space<vmem>>, %arg4: memref<1x384xf32, #tpu.memory_space<vmem>>, %arg5: memref<1x64x128xbf16, #tpu.memory_space<vmem>>, %arg6: memref<1x64x128xbf16, #tpu.memory_space<vmem>>, %arg7: memref<1x64x128xbf16, #tpu.memory_space<vmem>>) attributes {dimension_semantics = [#tpu.dimension_semantics<parallel>, #tpu.dimension_semantics<parallel>], iteration_bounds = array<i64: 2, 1>, scalar_prefetch = 0 : i64, scratch_operands = 0 : i64, tpu.core_type = #tpu.core_type<tc>, window_params = [{transform_indices = @transform_0, window_bounds = array<i64: 1, 128, 64>}, {pipeline_mode = #tpu.pipeline_mode<synchronous>, transform_indices = @transform_1, window_bounds = array<i64: 128, 384>}, {pipeline_mode = #tpu.pipeline_mode<synchronous>, transform_indices = @transform_2, window_bounds = array<i64: 1, 384>}, {transform_indices = @transform_3, window_bounds = array<i64: 1, 64, 128>}, {transform_indices = @transform_4, window_bounds = array<i64: 1, 64, 128>}, {transform_indices = @transform_5, window_bounds = array<i64: 1, 64, 128>}]} {
    %c0 = arith.constant 0 : index
    %c0_0 = arith.constant 0 : index
    %c0_1 = arith.constant 0 : index
    %0 = vector.load %arg2[%c0, %c0_0, %c0_1] : memref<1x128x64xf32, #tpu.memory_space<vmem>>, vector<1x128x64xf32>
    %1 = vector.shape_cast %0 : vector<1x128x64xf32> to vector<128x64xf32>
    %2 = tpu.transpose %1, [1, 0] : vector<128x64xf32> -> vector<64x128xf32>
    %3 = arith.truncf %2 : vector<64x128xf32> to vector<64x128xbf16>
    %c0_2 = arith.constant 0 : index
    %c0_3 = arith.constant 0 : index
    %4 = vector.load %arg3[%c0_2, %c0_3] : memref<128x384xbf16, #tpu.memory_space<vmem>>, vector<128x384xbf16>
    %cst = arith.constant dense<0.000000e+00> : vector<64x384xf32>
    %5 = tpu.matmul %3, %4, %cst {dimension_numbers = #tpu.dot_dimension_numbers<[1], [0], [0], [1], [0, 0, 1, 1], [], []>} : vector<64x128xbf16>, vector<128x384xbf16>, vector<64x384xf32> -> vector<64x384xf32>
    %c0_4 = arith.constant 0 : index
    %c0_5 = arith.constant 0 : index
    %6 = vector.load %arg4[%c0_4, %c0_5] : memref<1x384xf32, #tpu.memory_space<vmem>>, vector<1x384xf32>
    %7 = vector.broadcast %6 : vector<1x384xf32> to vector<64x384xf32>
    %8 = arith.addf %5, %7 : vector<64x384xf32>
    %9 = vector.extract_strided_slice %8 {offsets = [0, 0], sizes = [64, 128], strides = [1, 1]} : vector<64x384xf32> to vector<64x128xf32>
    %10 = arith.truncf %9 : vector<64x128xf32> to vector<64x128xbf16>
    %c0_6 = arith.constant 0 : index
    %c0_7 = arith.constant 0 : index
    %c0_8 = arith.constant 0 : index
    %11 = vector.load %arg5[%c0_6, %c0_7, %c0_8] : memref<1x64x128xbf16, #tpu.memory_space<vmem>>, vector<1x64x128xbf16>
    %12 = vector.shape_cast %11 : vector<1x64x128xbf16> to vector<64x128xbf16>
    %13 = vector.shape_cast %10 : vector<64x128xbf16> to vector<1x64x128xbf16>
    tpu.vector_store %arg5[%c0_6, %c0_7, %c0_8], %13 {strides = array<i32>} : memref<1x64x128xbf16, #tpu.memory_space<vmem>>, vector<1x64x128xbf16>,
    %14 = vector.extract_strided_slice %8 {offsets = [0, 128], sizes = [64, 128], strides = [1, 1]} : vector<64x384xf32> to vector<64x128xf32>
    %15 = arith.truncf %14 : vector<64x128xf32> to vector<64x128xbf16>
    %c0_9 = arith.constant 0 : index
    %c0_10 = arith.constant 0 : index
    %c0_11 = arith.constant 0 : index
    %16 = vector.load %arg6[%c0_9, %c0_10, %c0_11] : memref<1x64x128xbf16, #tpu.memory_space<vmem>>, vector<1x64x128xbf16>
    %17 = vector.shape_cast %16 : vector<1x64x128xbf16> to vector<64x128xbf16>
    %18 = vector.shape_cast %15 : vector<64x128xbf16> to vector<1x64x128xbf16>
    tpu.vector_store %arg6[%c0_9, %c0_10, %c0_11], %18 {strides = array<i32>} : memref<1x64x128xbf16, #tpu.memory_space<vmem>>, vector<1x64x128xbf16>,
    %19 = vector.extract_strided_slice %8 {offsets = [0, 256], sizes = [64, 128], strides = [1, 1]} : vector<64x384xf32> to vector<64x128xf32>
    %20 = arith.truncf %19 : vector<64x128xf32> to vector<64x128xbf16>
    %c0_12 = arith.constant 0 : index
    %c0_13 = arith.constant 0 : index
    %c0_14 = arith.constant 0 : index
    %21 = vector.load %arg7[%c0_12, %c0_13, %c0_14] : memref<1x64x128xbf16, #tpu.memory_space<vmem>>, vector<1x64x128xbf16>
    %22 = vector.shape_cast %21 : vector<1x64x128xbf16> to vector<64x128xbf16>
    %23 = vector.shape_cast %20 : vector<64x128xbf16> to vector<1x64x128xbf16>
    tpu.vector_store %arg7[%c0_12, %c0_13, %c0_14], %23 {strides = array<i32>} : memref<1x64x128xbf16, #tpu.memory_space<vmem>>, vector<1x64x128xbf16>,
    return
  }
  func.func @transform_0(%arg0: i32, %arg1: i32) -> (i32, i32, i32) {
    %c0_i32 = arith.constant 0 : i32
    %c0_i32_0 = arith.constant 0 : i32
    return %arg0, %c0_i32, %arg1 : i32, i32, i32
  }
  func.func @transform_1(%arg0: i32, %arg1: i32) -> (i32, i32) {
    %c0_i32 = arith.constant 0 : i32
    %c0_i32_0 = arith.constant 0 : i32
    %c0_i32_1 = arith.constant 0 : i32
    return %c0_i32, %c0_i32_0 : i32, i32
  }
  func.func @transform_2(%arg0: i32, %arg1: i32) -> (i32, i32) {
    %c0_i32 = arith.constant 0 : i32
    %c0_i32_0 = arith.constant 0 : i32
    %c0_i32_1 = arith.constant 0 : i32
    return %c0_i32, %c0_i32_0 : i32, i32
  }
  func.func @transform_3(%arg0: i32, %arg1: i32) -> (i32, i32, i32) {
    %c0_i32 = arith.constant 0 : i32
    %c0_i32_0 = arith.constant 0 : i32
    return %arg0, %arg1, %c0_i32 : i32, i32, i32
  }
  func.func @transform_4(%arg0: i32, %arg1: i32) -> (i32, i32, i32) {
    %c0_i32 = arith.constant 0 : i32
    %c0_i32_0 = arith.constant 0 : i32
    return %arg0, %arg1, %c0_i32 : i32, i32, i32
  }
  func.func @transform_5(%arg0: i32, %arg1: i32) -> (i32, i32, i32) {
    %c0_i32 = arith.constant 0 : i32
    %c0_i32_0 = arith.constant 0 : i32
    return %arg0, %arg1, %c0_i32 : i32, i32, i32
  }
}

</mosaic_0001>

<llo_original>
// kernel: tpu_custom_call.1
$region0: #{tpu_custom_call.1}
  #allocation0 [shape = 'u32[]', space=smem, size = 0x4, offset = 0x4, fixed_abs, tag = 'smem constant byte address 0x4 - core index']
  #allocation1 [shape = 'u32[144,128]{1,0:T(1,128)}', space=vmem, size = 0x12000, scoped, tag = 'internal scratch']
  %s0 = inlined_call_operand.vmem [shape: f32[2,128,64], index: 0, kind: input, shape index: {}]
  %s1 = inlined_call_operand.vmem [shape: bf16[128,384], index: 1, kind: input, shape index: {}]
  %s2 = inlined_call_operand.vmem [shape: f32[1,384], index: 2, kind: input, shape index: {}]
  %s3 = inlined_call_operand.hbm [shape: bf16[2,64,128], index: 3, kind: output, shape index: {0}]
  %s4 = inlined_call_operand.hbm [shape: bf16[2,64,128], index: 4, kind: output, shape index: {1}]
  %s5 = inlined_call_operand.hbm [shape: bf16[2,64,128], index: 5, kind: output, shape index: {2}]
  %6 = xla_tuple %s3, %s4, %s5
  %s7 = sld [smem:[#allocation0]]
  $region61: #{tpu_custom_call.1} parent=0
    _
  %s9 = ssub.s32 1, %s7
  %s10 = scalar_select 0, %s9, %s7
  $region1: #{tpu_custom_call.1} parent=0
    #allocation2 [shape = 'u8[32768]{0}', space=vmem, size = 0x8000, scoped, tag = 'output window, operand 0']
    #allocation3 [shape = 's32[2]{0}', space=sflag, size = 0x8, scoped, tag = 'scoped memory for tpu_custom_call.1']
    #allocation4 [shape = 'u8[32768]{0}', space=vmem, size = 0x8000, scoped, tag = 'output window, operand 1']
    #allocation5 [shape = 's32[2]{0}', space=sflag, size = 0x8, scoped, tag = 'scoped memory for tpu_custom_call.1']
    #allocation6 [shape = 'u8[32768]{0}', space=vmem, size = 0x8000, scoped, tag = 'output window, operand 2']
    %11 = vsyncpa [#allocation3], 0
    %s12 = scalar_lea.sflag [#allocation3], 1
    %13 = vsyncpa %s12, 0
    %14 = vsyncpa [#allocation5], 0
    %s15 = scalar_lea.sflag [#allocation5], 1
    %16 = vsyncpa %s15, 0
    loop: start=0, step=1, limit=4
    $region2: #{tpu_custom_call.1} parent=1 // loop_pre_header
      _
    $region3: #{tpu_custom_call.1} parent=1 // loop_header
      %s18 = sphi 0, %s22
      %p19 = scmp.ge.s32.totalorder %s18, 4
      %s25 = sphi 0, %s37
      %s26 = sphi 0, %s33
      %s27 = sphi 0, %s25
      %s28 = sphi 0, %s26
      %s29 = sphi 0, %s27
      %s30 = sphi 0, %s28
      %s42 = sphi 0, %s44
      %s45 = sphi 0, %s42
      %s46 = sphi 0, %s45
      %s62 = sphi 0, %s46
      %s66 = sphi 0, %s66
      %s68 = sphi 0, %s66
      %s69 = sphi 0, %s68
      %s83 = sphi 0, %s69
      %s87 = sphi 0, %s87
      %s89 = sphi 0, %s87
      %s90 = sphi 0, %s89
      %s104 = sphi 0, %s90
      %s112 = sphi 0, %s114
      %s115 = sphi 0, %s112
      %s116 = sphi 0, %s115
      %s132 = sphi 0, %s116
      %s140 = sphi 0, %s142
      %s143 = sphi 0, %s140
      %s144 = sphi 0, %s143
      %s160 = sphi 0, %s144
      %s168 = sphi 0, %s170
      %s171 = sphi 0, %s168
      %s172 = sphi 0, %s171
      %s188 = sphi 0, %s172
    $region4: #{tpu_custom_call.1} parent=1 // loop_header_branch
      %21 = sbr.rel (%p19) target = $region8
    $region5: #{tpu_custom_call.1} parent=1 // loop_body
      %s23 = ssub.s32 %s18, 1
      %s24 = ssub.s32 %s18, 2
      %s31 = sadd.s32 1, %s26
      %p32 = scmp.ge.s32.totalorder %s31, 1
      %s33 = scalar_select %p32, 0, %s31
      %s34 = sadd.s32 1, %s25
      %s35 = scalar_select %p32, %s34, %s25
      %p36 = scmp.ge.s32.totalorder %s35, 2
      %s37 = scalar_select %p36, 0, %s35
      %s38 = ssub.s32 %s25, %s37
      %s39 = ssub.s32 %s26, %s33
      %s40 = sor.u32 %s38, %s39
      %p41 = scmp.eq.s32.totalorder %s40, 0
      %s43 = sadd.s32 %s42, 1
      %s44 = scalar_select %p41, %s42, %s43
      %p47 = pneg %p41
      %p48 = scmp.eq.s32.totalorder %s18, 1
      %p49 = por %p47, %p48
      %p50 = scmp.ne.s32.totalorder %s42, %s45
      %p51 = scmp.eq.s32.totalorder %s18, 0
      %p52 = por %p50, %p51
      %p53 = scmp.ne.s32.totalorder %s42, %s45
      %p54 = scmp.eq.s32.totalorder %s23, 1
      %p55 = por %p53, %p54
      %p56 = scmp.ne.s32.totalorder %s45, %s46
      %p57 = scmp.eq.s32.totalorder %s23, 0
      %p58 = por %p56, %p57
      %p59 = scmp.ne.s32.totalorder %s45, %s46
      %p60 = scmp.eq.s32.totalorder %s24, 1
      %p61 = por %p59, %p60
      %p63 = scmp.ne.s32.totalorder %s46, %s62
      %p64 = scmp.eq.s32.totalorder %s24, 0
      %p65 = por %p63, %p64
      %s67 = sadd.s32 %s66, 1
      %p70 = scmp.eq.s32.totalorder %s18, 1
      %p71 = scmp.ne.s32.totalorder %s66, %s68
      %p72 = scmp.eq.s32.totalorder %s18, 0
      %p73 = por %p71, %p72
      %p74 = scmp.ne.s32.totalorder %s66, %s68
      %p75 = scmp.eq.s32.totalorder %s23, 1
      %p76 = por %p74, %p75
      %p77 = scmp.ne.s32.totalorder %s68, %s69
      %p78 = scmp.eq.s32.totalorder %s23, 0
      %p79 = por %p77, %p78
      %p80 = scmp.ne.s32.totalorder %s68, %s69
      %p81 = scmp.eq.s32.totalorder %s24, 1
      %p82 = por %p80, %p81
      %p84 = scmp.ne.s32.totalorder %s69, %s83
      %p85 = scmp.eq.s32.totalorder %s24, 0
      %p86 = por %p84, %p85
      %s88 = sadd.s32 %s87, 1
      %p91 = scmp.eq.s32.totalorder %s18, 1
      %p92 = scmp.ne.s32.totalorder %s87, %s89
      %p93 = scmp.eq.s32.totalorder %s18, 0
      %p94 = por %p92, %p93
      %p95 = scmp.ne.s32.totalorder %s87, %s89
      %p96 = scmp.eq.s32.totalorder %s23, 1
      %p97 = por %p95, %p96
      %p98 = scmp.ne.s32.totalorder %s89, %s90
      %p99 = scmp.eq.s32.totalorder %s23, 0
      %p100 = por %p98, %p99
      %p101 = scmp.ne.s32.totalorder %s89, %s90
      %p102 = scmp.eq.s32.totalorder %s24, 1
      %p103 = por %p101, %p102
      %p105 = scmp.ne.s32.totalorder %s90, %s104
      %p106 = scmp.eq.s32.totalorder %s24, 0
      %p107 = por %p105, %p106
      %s108 = ssub.s32 %s25, %s37
      %s109 = ssub.s32 %s26, %s33
      %s110 = sor.u32 %s108, %s109
      %p111 = scmp.eq.s32.totalorder %s110, 0
      %s113 = sadd.s32 %s112, 1
      %s114 = scalar_select %p111, %s112, %s113
      %p117 = pneg %p111
      %p118 = scmp.eq.s32.totalorder %s18, 1
      %p119 = por %p117, %p118
      %p120 = scmp.ne.s32.totalorder %s112, %s115
      %p121 = scmp.eq.s32.totalorder %s18, 0
      %p122 = por %p120, %p121
      %p123 = scmp.ne.s32.totalorder %s112, %s115
      %p124 = scmp.eq.s32.totalorder %s23, 1
      %p125 = por %p123, %p124
      %p126 = scmp.ne.s32.totalorder %s115, %s116
      %p127 = scmp.eq.s32.totalorder %s23, 0
      %p128 = por %p126, %p127
      %p129 = scmp.ne.s32.totalorder %s115, %s116
      %p130 = scmp.eq.s32.totalorder %s24, 1
      %p131 = por %p129, %p130
      %p133 = scmp.ne.s32.totalorder %s116, %s132
      %p134 = scmp.eq.s32.totalorder %s24, 0
      %p135 = por %p133, %p134
      %s136 = ssub.s32 %s25, %s37
      %s137 = ssub.s32 %s26, %s33
      %s138 = sor.u32 %s136, %s137
      %p139 = scmp.eq.s32.totalorder %s138, 0
      %s141 = sadd.s32 %s140, 1
      %s142 = scalar_select %p139, %s140, %s141
      %p145 = pneg %p139
      %p146 = scmp.eq.s32.totalorder %s18, 1
      %p147 = por %p145, %p146
      %p148 = scmp.ne.s32.totalorder %s140, %s143
      %p149 = scmp.eq.s32.totalorder %s18, 0
      %p150 = por %p148, %p149
      %p151 = scmp.ne.s32.totalorder %s140, %s143
      %p152 = scmp.eq.s32.totalorder %s23, 1
      %p153 = por %p151, %p152
      %p154 = scmp.ne.s32.totalorder %s143, %s144
      %p155 = scmp.eq.s32.totalorder %s23, 0
      %p156 = por %p154, %p155
      %p157 = scmp.ne.s32.totalorder %s143, %s144
      %p158 = scmp.eq.s32.totalorder %s24, 1
      %p159 = por %p157, %p158
      %p161 = scmp.ne.s32.totalorder %s144, %s160
      %p162 = scmp.eq.s32.totalorder %s24, 0
      %p163 = por %p161, %p162
      %s164 = ssub.s32 %s25, %s37
      %s165 = ssub.s32 %s26, %s33
      %s166 = sor.u32 %s164, %s165
      %p167 = scmp.eq.s32.totalorder %s166, 0
      %s169 = sadd.s32 %s168, 1
      %s170 = scalar_select %p167, %s168, %s169
      %p173 = pneg %p167
      %p174 = scmp.eq.s32.totalorder %s18, 1
      %p175 = por %p173, %p174
      %p176 = scmp.ne.s32.totalorder %s168, %s171
      %p177 = scmp.eq.s32.totalorder %s18, 0
      %p178 = por %p176, %p177
      %p179 = scmp.ne.s32.totalorder %s168, %s171
      %p180 = scmp.eq.s32.totalorder %s23, 1
      %p181 = por %p179, %p180
      %p182 = scmp.ne.s32.totalorder %s171, %s172
      %p183 = scmp.eq.s32.totalorder %s23, 0
      %p184 = por %p182, %p183
      %p185 = scmp.ne.s32.totalorder %s171, %s172
      %p186 = scmp.eq.s32.totalorder %s24, 1
      %p187 = por %p185, %p186
      %p189 = scmp.ne.s32.totalorder %s172, %s188
      %p190 = scmp.eq.s32.totalorder %s24, 0
      %p191 = por %p189, %p190
      %p192 = scmp.le.s32.totalorder 1, %s18
      %p193 = scmp.lt.s32.totalorder %s18, 3
      %p194 = pnand %p192, %p193
      %p195 = pneg %p194
      // Predicated region
      $region9: #{tpu_custom_call.1} parent=5 // pred_check
        _
      $region10: #{tpu_custom_call.1} parent=5 // pred_check_branch
        %197 = sbr.rel (%p194) target = $region12
      $region11: #{tpu_custom_call.1} parent=5 // pred_region
        %s198 = ssub.s32 %s18, 1
        // Predicated region
        $region13: #{tpu_custom_call.1} parent=11 // pred_check
          %p199 = pneg %p79
        $region14: #{tpu_custom_call.1} parent=11 // pred_check_branch
          %201 = sbr.rel (%p199) target = $region16
        $region15: #{tpu_custom_call.1} parent=11 // pred_region
          _
        $region16: #{tpu_custom_call.1} parent=11 // pred_fallthru
          _
        // Predicated region
        $region17: #{tpu_custom_call.1} parent=11 // pred_check
          %p202 = pneg %p100
        $region18: #{tpu_custom_call.1} parent=11 // pred_check_branch
          %204 = sbr.rel (%p202) target = $region20
        $region19: #{tpu_custom_call.1} parent=11 // pred_region
          _
        $region20: #{tpu_custom_call.1} parent=11 // pred_fallthru
          _
      $region12: #{tpu_custom_call.1} parent=5 // pred_fallthru
        _
      %p205 = scmp.lt.s32.totalorder %s18, 2
      // Predicated region
      $region21: #{tpu_custom_call.1} parent=5 // pred_check
        %p206 = pneg %p205
      $region22: #{tpu_custom_call.1} parent=5 // pred_check_branch
        %208 = sbr.rel (%p206) target = $region24
      $region23: #{tpu_custom_call.1} parent=5 // pred_region
        // Predicated region
        $region25: #{tpu_custom_call.1} parent=23 // pred_check
          %p209 = pneg %p52
        $region26: #{tpu_custom_call.1} parent=23 // pred_check_branch
          %211 = sbr.rel (%p209) target = $region28
        $region27: #{tpu_custom_call.1} parent=23 // pred_region
          %p212 = scmp.lt.s32.totalorder %s25, 1
          %s213 = scalar_select %p212, %s25, 1
          %p214 = scmp.lt.s32.totalorder %s26, 0
          %s215 = scalar_select %p214, %s26, 0
          %s216 = smul.addr %s213, 16
          %s217 = sadd.s32 %s215, %s216
          %s218 = smul.addr %s217, 8
          %s219 = scalar_lea.vmem %s0, %s218
        $region28: #{tpu_custom_call.1} parent=23 // pred_fallthru
          _
      $region24: #{tpu_custom_call.1} parent=5 // pred_fallthru
        _
      %p220 = scmp.le.s32.totalorder 1, %s18
      %p221 = scmp.lt.s32.totalorder %s18, 3
      %p222 = pnand %p220, %p221
      %p223 = pneg %p222
      // Predicated region
      $region29: #{tpu_custom_call.1} parent=5 // pred_check
        _
      $region30: #{tpu_custom_call.1} parent=5 // pred_check_branch
        %225 = sbr.rel (%p222) target = $region32
      $region31: #{tpu_custom_call.1} parent=5 // pred_region
        %s226 = ssub.s32 %s18, 1
        %p227 = scmp.lt.s32.totalorder %s27, 1
        %s228 = scalar_select %p227, %s27, 1
        %p229 = scmp.lt.s32.totalorder %s28, 0
        %s230 = scalar_select %p229, %s28, 0
        %s231 = smul.addr %s228, 16
        %s232 = sadd.s32 %s230, %s231
        %s233 = smul.addr %s232, 8
        %s234 = scalar_lea.vmem %s0, %s233
        %p235 = pneg %p58
        %p236 = pneg %p55
        %p237 = pneg %p79
        %p238 = pneg %p76
        %p239 = pneg %p100
        %p240 = pneg %p97
        %p241 = pneg %p128
        %p242 = pneg %p125
        %s243 = sand.u32 %s115, 1
        %s244 = scalar_lea.sflag [#allocation3], %s243
        %s245 = sand.u32 %s115, 1
        %s246 = smul.addr %s245, 32
        %s247 = scalar_lea.vmem [#allocation2], %s246
        %p248 = pneg %p156
        %p249 = pneg %p153
        %s250 = sand.u32 %s23, 1
        %s251 = scalar_lea.sflag [#allocation5], %s250
        %s252 = sand.u32 %s143, 1
        %s253 = smul.addr %s252, 32
        %s254 = scalar_lea.vmem [#allocation4], %s253
        %p255 = pneg %p184
        %p256 = pneg %p181
        %s257 = sand.u32 %s23, 1
        %s258 = scalar_lea.sflag [#allocation5], %s257
        %s259 = sand.u32 %s171, 1
        %s260 = smul.addr %s259, 32
        %s261 = scalar_lea.vmem [#allocation6], %s260
        %p262 = scmp.lt.s32.totalorder %s27, 1
        %s263 = scalar_select %p262, %s27, 1
        %p264 = scmp.lt.s32.totalorder %s28, 0
        %s265 = scalar_select %p264, %s28, 0
        %s266 = smul.addr %s263, 16
        %s267 = sadd.s32 %s265, %s266
        %s268 = smul.addr %s267, 8
        %s269 = scalar_lea.vmem %s0, %s268
        %s270 = smul.u32 8, %s28
        %s271 = smul.u32 8, %s28
        %s272 = smul.u32 8, %s28
        %v274 = vld [vmem:[%s269] sm:$0xff]
        %v275 = vld [vmem:[%s269 + $0x8] sm:$0xff]
        %v276 = vld [vmem:[%s269 + $0x10] sm:$0xff]
        %v277 = vld [vmem:[%s269 + $0x18] sm:$0xff]
        %v278 = vld [vmem:[%s269 + $0x20] sm:$0xff]
        %v279 = vld [vmem:[%s269 + $0x28] sm:$0xff]
        %v280 = vld [vmem:[%s269 + $0x30] sm:$0xff]
        %v281 = vld [vmem:[%s269 + $0x38] sm:$0xff]
        %v282 = vld [vmem:[%s269 + $0x40] sm:$0xff]
        %v283 = vld [vmem:[%s269 + $0x48] sm:$0xff]
        %v284 = vld [vmem:[%s269 + $0x50] sm:$0xff]
        %v285 = vld [vmem:[%s269 + $0x58] sm:$0xff]
        %v286 = vld [vmem:[%s269 + $0x60] sm:$0xff]
        %v287 = vld [vmem:[%s269 + $0x68] sm:$0xff]
        %v288 = vld [vmem:[%s269 + $0x70] sm:$0xff]
        %v289 = vld [vmem:[%s269 + $0x78] sm:$0xff]
        %290 = vxpose.xlu0.b32.start [1/16] %v274, 128
        %291 = vxpose.xlu0.b32.cont [2/16] %v275, 128
        %292 = vxpose.xlu0.b32.cont [3/16] %v276, 128
        %293 = vxpose.xlu0.b32.cont [4/16] %v277, 128
        %294 = vxpose.xlu0.b32.cont [5/16] %v278, 128
        %295 = vxpose.xlu0.b32.cont [6/16] %v279, 128
        %296 = vxpose.xlu0.b32.cont [7/16] %v280, 128
        %297 = vxpose.xlu0.b32.cont [8/16] %v281, 128
        %298 = vxpose.xlu0.b32.cont [9/16] %v282, 128
        %299 = vxpose.xlu0.b32.cont [10/16] %v283, 128
        %300 = vxpose.xlu0.b32.cont [11/16] %v284, 128
        %301 = vxpose.xlu0.b32.cont [12/16] %v285, 128
        %302 = vxpose.xlu0.b32.cont [13/16] %v286, 128
        %303 = vxpose.xlu0.b32.cont [14/16] %v287, 128
        %304 = vxpose.xlu0.b32.cont [15/16] %v288, 128
        %305 = vxpose.xlu0.b32.end [16/16] %v289, 128
        %v306 = vpop.trf.xlu0
        %v307 = vpop.trf.xlu0
        %v308 = vpop.trf.xlu0
        %v309 = vpop.trf.xlu0
        %v310 = vpop.trf.xlu0
        %v311 = vpop.trf.xlu0
        %v312 = vpop.trf.xlu0
        %v313 = vpop.trf.xlu0
        %v314 = vpop.trf.xlu0
        %v315 = vpop.trf.xlu0
        %v316 = vpop.trf.xlu0
        %v317 = vpop.trf.xlu0
        %v318 = vpop.trf.xlu0
        %v319 = vpop.trf.xlu0
        %v320 = vpop.trf.xlu0
        %v321 = vpop.trf.xlu0
        %v322 = vpack.c.bf16 %v307, %v306
        %v323 = vpack.c.bf16 %v309, %v308
        %v324 = vpack.c.bf16 %v311, %v310
        %v325 = vpack.c.bf16 %v313, %v312
        %v326 = vld [vmem:[%s1] sm:$0xff]
        %v327 = vld [vmem:[%s1 + $0x8] sm:$0xf]
        %v328 = vld [vmem:[%s1 + $0xc] sm:$0xff]
        %v329 = vld [vmem:[%s1 + $0x14] sm:$0xf]
        %v330 = vld [vmem:[%s1 + $0x18] sm:$0xff]
        %v331 = vld [vmem:[%s1 + $0x20] sm:$0xf]
        %v332 = vld [vmem:[%s1 + $0x24] sm:$0xff]
        %v333 = vld [vmem:[%s1 + $0x2c] sm:$0xf]
        %v334 = vld [vmem:[%s1 + $0x30] sm:$0xff]
        %v335 = vld [vmem:[%s1 + $0x38] sm:$0xf]
        %v336 = vld [vmem:[%s1 + $0x3c] sm:$0xff]
        %v337 = vld [vmem:[%s1 + $0x44] sm:$0xf]
        %v338 = vld [vmem:[%s1 + $0x48] sm:$0xff]
        %v339 = vld [vmem:[%s1 + $0x50] sm:$0xf]
        %v340 = vld [vmem:[%s1 + $0x54] sm:$0xff]
        %v341 = vld [vmem:[%s1 + $0x5c] sm:$0xf]
        %v342 = vld [vmem:[%s1 + $0x60] sm:$0xff]
        %v343 = vld [vmem:[%s1 + $0x68] sm:$0xf]
        %v344 = vld [vmem:[%s1 + $0x6c] sm:$0xff]
        %v345 = vld [vmem:[%s1 + $0x74] sm:$0xf]
        %v346 = vld [vmem:[%s1 + $0x78] sm:$0xff]
        %v347 = vld [vmem:[%s1 + $0x80] sm:$0xf]
        %v348 = vld [vmem:[%s1 + $0x84] sm:$0xff]
        %v349 = vld [vmem:[%s1 + $0x8c] sm:$0xf]
        %v350 = vld [vmem:[%s1 + $0x90] sm:$0xff]
        %v351 = vld [vmem:[%s1 + $0x98] sm:$0xf]
        %v352 = vld [vmem:[%s1 + $0x9c] sm:$0xff]
        %v353 = vld [vmem:[%s1 + $0xa4] sm:$0xf]
        %v354 = vld [vmem:[%s1 + $0xa8] sm:$0xff]
        %v355 = vld [vmem:[%s1 + $0xb0] sm:$0xf]
        %v356 = vld [vmem:[%s1 + $0xb4] sm:$0xff]
        %v357 = vld [vmem:[%s1 + $0xbc] sm:$0xf]
        %v358 = vld [vmem:[%s2] sm:$0x7]
        %v360 = vlaneseq
        %v361 = vshrl.u32 %v360, 7
        %v362 = vsub.s32 0, %v361
        %v363 = vrot.slane %v358, %v362
        %v364 = vlaneseq
        %v365 = vshrl.u32 %v364, 7
        %v366 = vsub.s32 1, %v365
        %v367 = vrot.slane %v358, %v366
        %v368 = vlaneseq
        %v369 = vshrl.u32 %v368, 7
        %v370 = vsub.s32 2, %v369
        %v371 = vrot.slane %v358, %v370
        %v407 = vunpack.c.l.b16 %v326
        %v408 = vunpack.c.h.b16 %v326
        %v409 = vunpack.c.l.b16 %v327
        %v410 = vunpack.c.l.b16 %v328
        %v411 = vunpack.c.h.b16 %v328
        %v412 = vunpack.c.l.b16 %v329
        %v413 = vunpack.c.l.b16 %v330
        %v414 = vunpack.c.h.b16 %v330
        %v415 = vunpack.c.l.b16 %v331
        %v416 = vunpack.c.l.b16 %v332
        %v417 = vunpack.c.h.b16 %v332
        %v418 = vunpack.c.l.b16 %v333
        %v419 = vunpack.c.l.b16 %v334
        %v420 = vunpack.c.h.b16 %v334
        %v421 = vunpack.c.l.b16 %v335
        %v422 = vunpack.c.l.b16 %v336
        %v423 = vunpack.c.h.b16 %v336
        %v424 = vunpack.c.l.b16 %v337
        %v425 = vunpack.c.l.b16 %v338
        %v426 = vunpack.c.h.b16 %v338
        %v427 = vunpack.c.l.b16 %v339
        %v428 = vunpack.c.l.b16 %v340
        %v429 = vunpack.c.h.b16 %v340
        %v430 = vunpack.c.l.b16 %v341
        %v431 = vunpack.c.l.b16 %v342
        %v432 = vunpack.c.h.b16 %v342
        %v433 = vunpack.c.l.b16 %v343
        %v434 = vunpack.c.l.b16 %v344
        %v435 = vunpack.c.h.b16 %v344
        %v436 = vunpack.c.l.b16 %v345
        %v437 = vunpack.c.l.b16 %v346
        %v438 = vunpack.c.h.b16 %v346
        %v439 = vunpack.c.l.b16 %v347
        %v440 = vunpack.c.l.b16 %v348
        %v441 = vunpack.c.h.b16 %v348
        %v442 = vunpack.c.l.b16 %v349
        %v443 = vunpack.c.l.b16 %v350
        %v444 = vunpack.c.h.b16 %v350
        %v445 = vunpack.c.l.b16 %v351
        %v446 = vunpack.c.l.b16 %v352
        %v447 = vunpack.c.h.b16 %v352
        %v448 = vunpack.c.l.b16 %v353
        %v449 = vunpack.c.l.b16 %v354
        %v450 = vunpack.c.h.b16 %v354
        %v451 = vunpack.c.l.b16 %v355
        %v452 = vunpack.c.l.b16 %v356
        %v453 = vunpack.c.h.b16 %v356
        %v454 = vunpack.c.l.b16 %v357
        %v455 = vpack.c.b16 %v410, %v407
        %v456 = vpack.c.b16 %v411, %v408
        %v457 = vpack.c.b16 %v412, %v409
        %v458 = vpack.c.b16 %v416, %v413
        %v459 = vpack.c.b16 %v417, %v414
        %v460 = vpack.c.b16 %v418, %v415
        %v461 = vpack.c.b16 %v422, %v419
        %v462 = vpack.c.b16 %v423, %v420
        %v463 = vpack.c.b16 %v424, %v421
        %v464 = vpack.c.b16 %v428, %v425
        %v465 = vpack.c.b16 %v429, %v426
        %v466 = vpack.c.b16 %v430, %v427
        %v467 = vpack.c.b16 %v434, %v431
        %v468 = vpack.c.b16 %v435, %v432
        %v469 = vpack.c.b16 %v436, %v433
        %v470 = vpack.c.b16 %v440, %v437
        %v471 = vpack.c.b16 %v441, %v438
        %v472 = vpack.c.b16 %v442, %v439
        %v473 = vpack.c.b16 %v446, %v443
        %v474 = vpack.c.b16 %v447, %v444
        %v475 = vpack.c.b16 %v448, %v445
        %v476 = vpack.c.b16 %v452, %v449
        %v477 = vpack.c.b16 %v453, %v450
        %v478 = vpack.c.b16 %v454, %v451
        %503 = vmatprep.subr.bf16.mxu0 %v456
        %504 = vmatpush1.bf16.msra.mxu0 %v455
        %505 = vmatprep.subr.bf16.mxu0 %v459
        %506 = vmatpush1.bf16.msra.mxu0 %v458
        %507 = vmatprep.subr.bf16.mxu0 %v462
        %508 = vmatpush1.bf16.msra.mxu0 %v461
        %509 = vmatprep.subr.bf16.mxu0 %v465
        %510 = vmatpush1.bf16.msra.mxu0 %v464
        %511 = vmatprep.subr.bf16.mxu0 %v468
        %512 = vmatpush1.bf16.msra.mxu0 %v467
        %513 = vmatprep.subr.bf16.mxu0 %v471
        %514 = vmatpush1.bf16.msra.mxu0 %v470
        %515 = vmatprep.subr.bf16.mxu0 %v474
        %516 = vmatpush1.bf16.msra.mxu0 %v473
        %517 = vmatprep.subr.bf16.mxu0 %v477
        %518 = vmatpush1.bf16.msra.mxu0 %v476
        %519 = vmatprep.subr.bf16.mxu0 0
        %520 = vmatpush1.bf16.msra.mxu0 0
        %521 = vmatprep.subr.bf16.mxu0 0
        %522 = vmatpush1.bf16.msra.mxu0 0
        %523 = vmatprep.subr.bf16.mxu0 0
        %524 = vmatpush1.bf16.msra.mxu0 0
        %525 = vmatprep.subr.bf16.mxu0 0
        %526 = vmatpush1.bf16.msra.mxu0 0
        %527 = vmatprep.subr.bf16.mxu0 0
        %528 = vmatpush1.bf16.msra.mxu0 0
        %529 = vmatprep.subr.bf16.mxu0 0
        %530 = vmatpush1.bf16.msra.mxu0 0
        %531 = vmatprep.subr.bf16.mxu0 0
        %532 = vmatpush1.bf16.msra.mxu0 0
        %533 = vmatprep.subr.bf16.mxu0 0
        %534 = vmatpush1.bf16.msra.mxu0 0
        %535 = vmatprep.mubr.bf16.mxu0 0
        %536 = vmatmul.mubr.bf16.gmra.mrb[0].mxu0 %v322
        %v537 = vpop.f32.mrb[0].mxu0
        %v538 = vadd.f32 %v363, %v537
        %v539 = vpop.f32.mrb[0].mxu0
        %v540 = vadd.f32 %v367, %v539
        %v541 = vpop.f32.mrb[0].mxu0
        %v542 = vadd.f32 %v363, %v541
        %v543 = vpop.f32.mrb[0].mxu0
        %v544 = vadd.f32 %v367, %v543
        %545 = vmatprep.mubr.bf16.mxu0 0
        %546 = vmatmul.mubr.bf16.gmra.mrb[0].mxu0 %v323
        %v547 = vpop.f32.mrb[0].mxu0
        %v548 = vadd.f32 %v363, %v547
        %v549 = vpop.f32.mrb[0].mxu0
        %v550 = vadd.f32 %v367, %v549
        %v551 = vpop.f32.mrb[0].mxu0
        %v552 = vadd.f32 %v363, %v551
        %v553 = vpop.f32.mrb[0].mxu0
        %v554 = vadd.f32 %v367, %v553
        %555 = vmatprep.mubr.bf16.mxu0 0
        %556 = vmatmul.mubr.bf16.gmra.mrb[0].mxu0 %v324
        %v557 = vpop.f32.mrb[0].mxu0
        %v558 = vadd.f32 %v363, %v557
        %v559 = vpop.f32.mrb[0].mxu0
        %v560 = vadd.f32 %v367, %v559
        %v561 = vpop.f32.mrb[0].mxu0
        %v562 = vadd.f32 %v363, %v561
        %v563 = vpop.f32.mrb[0].mxu0
        %v564 = vadd.f32 %v367, %v563
        %565 = vmatprep.mubr.bf16.mxu0 0
        %566 = vmatmul.mubr.bf16.gmra.mrb[0].mxu0 %v325
        %v567 = vpop.f32.mrb[0].mxu0
        %v568 = vadd.f32 %v363, %v567
        %v569 = vpop.f32.mrb[0].mxu0
        %v570 = vadd.f32 %v367, %v569
        %v571 = vpop.f32.mrb[0].mxu0
        %v572 = vadd.f32 %v363, %v571
        %v573 = vpop.f32.mrb[0].mxu0
        %v574 = vadd.f32 %v367, %v573
        %575 = vdwg.mxu0
        %576 = vmatprep.subr.bf16.mxu0 0
        %577 = vmatpush1.bf16.msra.mxu0 %v457
        %578 = vmatprep.subr.bf16.mxu0 0
        %579 = vmatpush1.bf16.msra.mxu0 %v460
        %580 = vmatprep.subr.bf16.mxu0 0
        %581 = vmatpush1.bf16.msra.mxu0 %v463
        %582 = vmatprep.subr.bf16.mxu0 0
        %583 = vmatpush1.bf16.msra.mxu0 %v466
        %584 = vmatprep.subr.bf16.mxu0 0
        %585 = vmatpush1.bf16.msra.mxu0 %v469
        %586 = vmatprep.subr.bf16.mxu0 0
        %587 = vmatpush1.bf16.msra.mxu0 %v472
        %588 = vmatprep.subr.bf16.mxu0 0
        %589 = vmatpush1.bf16.msra.mxu0 %v475
        %590 = vmatprep.subr.bf16.mxu0 0
        %591 = vmatpush1.bf16.msra.mxu0 %v478
        %592 = vmatprep.subr.bf16.mxu0 0
        %593 = vmatpush1.bf16.msra.mxu0 0
        %594 = vmatprep.subr.bf16.mxu0 0
        %595 = vmatpush1.bf16.msra.mxu0 0
        %596 = vmatprep.subr.bf16.mxu0 0
        %597 = vmatpush1.bf16.msra.mxu0 0
        %598 = vmatprep.subr.bf16.mxu0 0
        %599 = vmatpush1.bf16.msra.mxu0 0
        %600 = vmatprep.subr.bf16.mxu0 0
        %601 = vmatpush1.bf16.msra.mxu0 0
        %602 = vmatprep.subr.bf16.mxu0 0
        %603 = vmatpush1.bf16.msra.mxu0 0
        %604 = vmatprep.subr.bf16.mxu0 0
        %605 = vmatpush1.bf16.msra.mxu0 0
        %606 = vmatprep.subr.bf16.mxu0 0
        %607 = vmatpush1.bf16.msra.mxu0 0
        %608 = vmatprep.mubr.bf16.mxu0 0
        %609 = vmatmul.mubr.bf16.gmra.mrb[0].mxu0 %v322
        %v610 = vpop.f32.mrb[0].mxu0
        %v611 = vadd.f32 %v371, %v610
        %v612 = vpop.f32.mrb[0].mxu0
        %v613 = vpop.f32.mrb[0].mxu0
        %v614 = vadd.f32 %v371, %v613
        %v615 = vpop.f32.mrb[0].mxu0
        %616 = vmatprep.mubr.bf16.mxu0 0
        %617 = vmatmul.mubr.bf16.gmra.mrb[0].mxu0 %v323
        %v618 = vpop.f32.mrb[0].mxu0
        %v619 = vadd.f32 %v371, %v618
        %v620 = vpop.f32.mrb[0].mxu0
        %v621 = vpop.f32.mrb[0].mxu0
        %v622 = vadd.f32 %v371, %v621
        %v623 = vpop.f32.mrb[0].mxu0
        %624 = vmatprep.mubr.bf16.mxu0 0
        %625 = vmatmul.mubr.bf16.gmra.mrb[0].mxu0 %v324
        %v626 = vpop.f32.mrb[0].mxu0
        %v627 = vadd.f32 %v371, %v626
        %v628 = vpop.f32.mrb[0].mxu0
        %v629 = vpop.f32.mrb[0].mxu0
        %v630 = vadd.f32 %v371, %v629
        %v631 = vpop.f32.mrb[0].mxu0
        %632 = vmatprep.mubr.bf16.mxu0 0
        %633 = vmatmul.mubr.bf16.gmra.mrb[0].mxu0 %v325
        %v634 = vpop.f32.mrb[0].mxu0
        %v635 = vadd.f32 %v371, %v634
        %v636 = vpop.f32.mrb[0].mxu0
        %v637 = vpop.f32.mrb[0].mxu0
        %v638 = vadd.f32 %v371, %v637
        %v639 = vpop.f32.mrb[0].mxu0
        %640 = vdwg.mxu0
        %v641 = vpack.c.bf16 %v542, %v538
        %v642 = vpack.c.bf16 %v552, %v548
        %v643 = vpack.c.bf16 %v562, %v558
        %v644 = vpack.c.bf16 %v572, %v568
        %v649 = vunpack.c.l.b16 %v641
        %v650 = vunpack.c.h.b16 %v641
        %v651 = vunpack.c.l.b16 %v642
        %v652 = vunpack.c.h.b16 %v642
        %v653 = vunpack.c.l.b16 %v643
        %v654 = vunpack.c.h.b16 %v643
        %v655 = vunpack.c.l.b16 %v644
        %v656 = vunpack.c.h.b16 %v644
        %v657 = vpack.c.b16 %v649, %v649
        %v658 = vpack.c.b16 %v650, %v650
        %v659 = vpack.c.b16 %v651, %v651
        %v660 = vpack.c.b16 %v652, %v652
        %v661 = vpack.c.b16 %v653, %v653
        %v662 = vpack.c.b16 %v654, %v654
        %v663 = vpack.c.b16 %v655, %v655
        %v664 = vpack.c.b16 %v656, %v656
        %673 = vst [vmem:[%s247] sm:$0xf] %v657
        %674 = vst [vmem:[%s247 + $0x4] sm:$0xf] %v658
        %675 = vst [vmem:[%s247 + $0x8] sm:$0xf] %v659
        %676 = vst [vmem:[%s247 + $0xc] sm:$0xf] %v660
        %677 = vst [vmem:[%s247 + $0x10] sm:$0xf] %v661
        %678 = vst [vmem:[%s247 + $0x14] sm:$0xf] %v662
        %679 = vst [vmem:[%s247 + $0x18] sm:$0xf] %v663
        %680 = vst [vmem:[%s247 + $0x1c] sm:$0xf] %v664
        %v681 = vpack.c.bf16 %v544, %v540
        %v682 = vpack.c.bf16 %v554, %v550
        %v683 = vpack.c.bf16 %v564, %v560
        %v684 = vpack.c.bf16 %v574, %v570
        %v689 = vunpack.c.l.b16 %v681
        %v690 = vunpack.c.h.b16 %v681
        %v691 = vunpack.c.l.b16 %v682
        %v692 = vunpack.c.h.b16 %v682
        %v693 = vunpack.c.l.b16 %v683
        %v694 = vunpack.c.h.b16 %v683
        %v695 = vunpack.c.l.b16 %v684
        %v696 = vunpack.c.h.b16 %v684
        %v697 = vpack.c.b16 %v689, %v689
        %v698 = vpack.c.b16 %v690, %v690
        %v699 = vpack.c.b16 %v691, %v691
        %v700 = vpack.c.b16 %v692, %v692
        %v701 = vpack.c.b16 %v693, %v693
        %v702 = vpack.c.b16 %v694, %v694
        %v703 = vpack.c.b16 %v695, %v695
        %v704 = vpack.c.b16 %v696, %v696
        %713 = vst [vmem:[%s254] sm:$0xf] %v697
        %714 = vst [vmem:[%s254 + $0x4] sm:$0xf] %v698
        %715 = vst [vmem:[%s254 + $0x8] sm:$0xf] %v699
        %716 = vst [vmem:[%s254 + $0xc] sm:$0xf] %v700
        %717 = vst [vmem:[%s254 + $0x10] sm:$0xf] %v701
        %718 = vst [vmem:[%s254 + $0x14] sm:$0xf] %v702
        %719 = vst [vmem:[%s254 + $0x18] sm:$0xf] %v703
        %720 = vst [vmem:[%s254 + $0x1c] sm:$0xf] %v704
        %v721 = vpack.c.bf16 %v614, %v611
        %v722 = vpack.c.bf16 %v622, %v619
        %v723 = vpack.c.bf16 %v630, %v627
        %v724 = vpack.c.bf16 %v638, %v635
        %v729 = vunpack.c.l.b16 %v721
        %v730 = vunpack.c.h.b16 %v721
        %v731 = vunpack.c.l.b16 %v722
        %v732 = vunpack.c.h.b16 %v722
        %v733 = vunpack.c.l.b16 %v723
        %v734 = vunpack.c.h.b16 %v723
        %v735 = vunpack.c.l.b16 %v724
        %v736 = vunpack.c.h.b16 %v724
        %v737 = vpack.c.b16 %v729, %v729
        %v738 = vpack.c.b16 %v730, %v730
        %v739 = vpack.c.b16 %v731, %v731
        %v740 = vpack.c.b16 %v732, %v732
        %v741 = vpack.c.b16 %v733, %v733
        %v742 = vpack.c.b16 %v734, %v734
        %v743 = vpack.c.b16 %v735, %v735
        %v744 = vpack.c.b16 %v736, %v736
        %753 = vst [vmem:[%s261] sm:$0xf] %v737
        %754 = vst [vmem:[%s261 + $0x4] sm:$0xf] %v738
        %755 = vst [vmem:[%s261 + $0x8] sm:$0xf] %v739
        %756 = vst [vmem:[%s261 + $0xc] sm:$0xf] %v740
        %757 = vst [vmem:[%s261 + $0x10] sm:$0xf] %v741
        %758 = vst [vmem:[%s261 + $0x14] sm:$0xf] %v742
        %759 = vst [vmem:[%s261 + $0x18] sm:$0xf] %v743
        %760 = vst [vmem:[%s261 + $0x1c] sm:$0xf] %v744
        %s761 = sand.u32 %s115, 1
        %s762 = scalar_lea.sflag [#allocation3], %s761
        %s763 = sand.u32 %s115, 1
        %s764 = smul.addr %s763, 32
        %s765 = scalar_lea.vmem [#allocation2], %s764
        %s766 = sand.u32 %s23, 1
        %s767 = scalar_lea.sflag [#allocation5], %s766
        %s768 = sand.u32 %s143, 1
        %s769 = smul.addr %s768, 32
        %s770 = scalar_lea.vmem [#allocation4], %s769
        %s771 = sand.u32 %s23, 1
        %s772 = scalar_lea.sflag [#allocation5], %s771
        %s773 = sand.u32 %s171, 1
        %s774 = smul.addr %s773, 32
        %s775 = scalar_lea.vmem [#allocation6], %s774
        // Predicated region
        $region33: #{tpu_custom_call.1} parent=31 // pred_check
          %p776 = pneg %p125
        $region34: #{tpu_custom_call.1} parent=31 // pred_check_branch
          %778 = sbr.rel (%p776) target = $region36
        $region35: #{tpu_custom_call.1} parent=31 // pred_region
          %s779 = smul.u32 8, %s28
          %s781 = ssub.s32 512, 512
          %782 = vsyncadd %s762, %s781
          %s783 = smul.addr %s27, 8
          %s784 = sadd.s32 %s779, %s783
          %s785 = smul.addr %s784, 64
          %s786 = scalar_lea.hbm %s3, %s785
          %s787 = sshll.u32 %s765, 4
          %s788 = int_to_ptr.vmem [resolvable:$true] %s787
          %793 = dma.vmem_to_hbm [thread:$0]  %s788, 512, %s786, %s762, 64, 64, 4
        $region36: #{tpu_custom_call.1} parent=31 // pred_fallthru
          _
        // Predicated region
        $region37: #{tpu_custom_call.1} parent=31 // pred_check
          %p794 = pneg %p153
        $region38: #{tpu_custom_call.1} parent=31 // pred_check_branch
          %796 = sbr.rel (%p794) target = $region40
        $region39: #{tpu_custom_call.1} parent=31 // pred_region
          %s797 = smul.u32 8, %s28
          %s799 = ssub.s32 512, 512
          %800 = vsyncadd %s767, %s799
          %s801 = smul.addr %s27, 8
          %s802 = sadd.s32 %s797, %s801
          %s803 = smul.addr %s802, 64
          %s804 = scalar_lea.hbm %s4, %s803
          %s805 = sshll.u32 %s770, 4
          %s806 = int_to_ptr.vmem [resolvable:$true] %s805
          %811 = dma.vmem_to_hbm [thread:$0]  %s806, 512, %s804, %s767, 64, 64, 4
        $region40: #{tpu_custom_call.1} parent=31 // pred_fallthru
          _
        // Predicated region
        $region41: #{tpu_custom_call.1} parent=31 // pred_check
          %p812 = pneg %p181
        $region42: #{tpu_custom_call.1} parent=31 // pred_check_branch
          %814 = sbr.rel (%p812) target = $region44
        $region43: #{tpu_custom_call.1} parent=31 // pred_region
          %s815 = smul.u32 8, %s28
          %s817 = ssub.s32 512, 512
          %818 = vsyncadd %s772, %s817
          %s819 = smul.addr %s27, 8
          %s820 = sadd.s32 %s815, %s819
          %s821 = smul.addr %s820, 64
          %s822 = scalar_lea.hbm %s5, %s821
          %s823 = sshll.u32 %s775, 4
          %s824 = int_to_ptr.vmem [resolvable:$true] %s823
          %829 = dma.vmem_to_hbm [thread:$0]  %s824, 512, %s822, %s772, 64, 64, 4
        $region44: #{tpu_custom_call.1} parent=31 // pred_fallthru
          _
      $region32: #{tpu_custom_call.1} parent=5 // pred_fallthru
        _
      %p830 = scmp.le.s32.totalorder 2, %s18
      // Predicated region
      $region45: #{tpu_custom_call.1} parent=5 // pred_check
        %p831 = pneg %p830
      $region46: #{tpu_custom_call.1} parent=5 // pred_check_branch
        %833 = sbr.rel (%p831) target = $region48
      $region47: #{tpu_custom_call.1} parent=5 // pred_region
        %s834 = ssub.s32 %s18, 2
        // Predicated region
        $region49: #{tpu_custom_call.1} parent=47 // pred_check
          %p835 = pneg %p131
        $region50: #{tpu_custom_call.1} parent=47 // pred_check_branch
          %837 = sbr.rel (%p835) target = $region52
        $region51: #{tpu_custom_call.1} parent=47 // pred_region
          %s838 = sand.u32 %s116, 1
          %s839 = scalar_lea.sflag [#allocation3], %s838
          %s840 = sand.u32 %s116, 1
          %s841 = smul.addr %s840, 32
          %s842 = scalar_lea.vmem [#allocation2], %s841
          %843 = dma.done %s839, 512
        $region52: #{tpu_custom_call.1} parent=47 // pred_fallthru
          _
        // Predicated region
        $region53: #{tpu_custom_call.1} parent=47 // pred_check
          %p844 = pneg %p159
        $region54: #{tpu_custom_call.1} parent=47 // pred_check_branch
          %846 = sbr.rel (%p844) target = $region56
        $region55: #{tpu_custom_call.1} parent=47 // pred_region
          %s847 = sand.u32 %s24, 1
          %s848 = scalar_lea.sflag [#allocation5], %s847
          %s849 = sand.u32 %s144, 1
          %s850 = smul.addr %s849, 32
          %s851 = scalar_lea.vmem [#allocation4], %s850
          %852 = dma.done %s848, 512
        $region56: #{tpu_custom_call.1} parent=47 // pred_fallthru
          _
        // Predicated region
        $region57: #{tpu_custom_call.1} parent=47 // pred_check
          %p853 = pneg %p187
        $region58: #{tpu_custom_call.1} parent=47 // pred_check_branch
          %855 = sbr.rel (%p853) target = $region60
        $region59: #{tpu_custom_call.1} parent=47 // pred_region
          %s856 = sand.u32 %s24, 1
          %s857 = scalar_lea.sflag [#allocation5], %s856
          %s858 = sand.u32 %s172, 1
          %s859 = smul.addr %s858, 32
          %s860 = scalar_lea.vmem [#allocation6], %s859
          %861 = dma.done %s857, 512
        $region60: #{tpu_custom_call.1} parent=47 // pred_fallthru
          _
      $region48: #{tpu_custom_call.1} parent=5 // pred_fallthru
        _
    $region6: #{tpu_custom_call.1} parent=1 // loop_footer
      %s22 = sadd.s32 1, %s18
    $region7: #{tpu_custom_call.1} parent=1 // loop_footer_branch
      %17 = sbr.rel target = $region3
    $region8: #{tpu_custom_call.1} parent=1 // loop_exit
      _
    %862 = vsyncpa [#allocation3], 1
    %s863 = scalar_lea.sflag [#allocation3], 1
    %864 = vsyncpa %s863, 1
    %865 = vsyncpa [#allocation5], 1
    %s866 = scalar_lea.sflag [#allocation5], 1
    %867 = vsyncpa %s866, 1

</llo_original>
